<compile_context>
chip_gen: v7x
topology: tpu7x:2x2x1
jax: 0.10.0
libtpu: 0.0.40
codegen_flags: <defaults>
</compile_context>

<pallas_src>
import functools
from typing import Sequence

import jax
import jax.numpy as jnp
from jax.experimental import pallas as pl
from jax.experimental.pallas import tpu as pltpu

_LANE = 128


def _mlp_kernel(*refs, num_layers: int, relu: bool):
    """refs = (x_ref, w0, b0, w1, b1, ..., w_{L-1}, b_{L-1}, out_ref).

    Chains all Linear(+activation) layers with intermediates kept in
    vregs; only the final (lane-dense, padded) result is stored.
    """
    x_ref = refs[0]
    out_ref = refs[-1]

    h = x_ref[...]
    for i in range(num_layers):
        w = refs[1 + 2 * i][...]          # [Din_i, Dout_i]
        b = refs[2 + 2 * i][...]          # [1, Dout_i], broadcasts over batch
        h = jnp.dot(h, w, preferred_element_type=jnp.float32) + b
        if i < num_layers - 1:
            # Hidden-layer activation, fused in-kernel (VPU for relu, EUP for tanh).
            h = jnp.maximum(h, 0.0) if relu else jnp.tanh(h)
    out_ref[...] = h.astype(out_ref.dtype)


@functools.partial(jax.jit, static_argnames=("relu",))
def neural_net_forward(x, params, relu: bool = True):
    """Sequential MLP: Linear -> act -> ... -> Linear (no act on last layer).

    One fused pallas_call for the entire network.
    """
    x = x.astype(jnp.float32)
    B = x.shape[0]
    n = len(params)

    # Pad the final projection to a lane-dense (multiple-of-128) output width.
    w_last, _ = params[-1]
    dout = w_last.shape[1]
    dout_pad = max(_LANE, ((dout + _LANE - 1) // _LANE) * _LANE)

    flat_inputs = [x]
    in_specs = [pl.BlockSpec(memory_space=pltpu.MemorySpace.VMEM)]
    for i, (w, b) in enumerate(params):
        if i == n - 1:
            # Zero-padded extra columns produce zeros that the wrapper slices off.
            w = jnp.pad(w, ((0, 0), (0, dout_pad - dout)))
            b = jnp.pad(b, ((0, dout_pad - dout),))
        flat_inputs.append(w)
        flat_inputs.append(b.reshape(1, -1))
        in_specs.append(pl.BlockSpec(memory_space=pltpu.MemorySpace.VMEM))
        in_specs.append(pl.BlockSpec(memory_space=pltpu.MemorySpace.VMEM))

    kernel = functools.partial(_mlp_kernel, num_layers=n, relu=relu)
    out_padded = pl.pallas_call(
        kernel,
        out_shape=jax.ShapeDtypeStruct((B, dout_pad), jnp.float32),
        in_specs=in_specs,
        out_specs=pl.BlockSpec(memory_space=pltpu.MemorySpace.VMEM),
    )(*flat_inputs)

    return out_padded[:, :dout]


def init_params(layer_dimensions: Sequence[int], key, relu: bool = True):
    """Deterministic parameter init matching the PyTorch module:
    kaiming_uniform_ (ReLU=True) or xavier_normal_ (ReLU=False) on weights,
    bias = ones."""
    params = []
    for i in range(len(layer_dimensions) - 1):
        fan_in = layer_dimensions[i]
        fan_out = layer_dimensions[i + 1]
        key, wkey = jax.random.split(key)
        if relu:
            # torch.nn.init.kaiming_uniform_ default: a=0 -> gain=sqrt(2)
            bound = jnp.sqrt(2.0) * jnp.sqrt(3.0 / fan_in)
            w_t = jax.random.uniform(
                wkey, (fan_out, fan_in), jnp.float32, -bound, bound
            )
        else:
            # torch.nn.init.xavier_normal_
            std = jnp.sqrt(2.0 / (fan_in + fan_out))
            w_t = std * jax.random.normal(wkey, (fan_out, fan_in), jnp.float32)
        w = w_t.T  # store as [in, out]
        b = jnp.ones((fan_out,), jnp.float32)
        params.append((w, b))
    return params


def _reference_forward(x, params, relu: bool = True):
    out = x.astype(jnp.float32)
    n = len(params)
    for i, (w, b) in enumerate(params):
        out = out @ w + b
        if i < n - 1:
            out = jnp.maximum(out, 0.0) if relu else jnp.tanh(out)
    return out


if __name__ == "__main__":
    key = jax.random.PRNGKey(0)
    layer_dimensions = [16, 32, 32, 1]
    batch = 8

    key, pkey_relu, pkey_tanh, xkey = jax.random.split(key, 4)
    x = jax.random.normal(xkey, (batch, layer_dimensions[0]), jnp.float32)

    # ReLU path (default of the PyTorch module).
    params_relu = init_params(layer_dimensions, pkey_relu, relu=True)
    out_relu = jax.block_until_ready(neural_net_forward(x, params_relu, relu=True))
    ref_relu = _reference_forward(x, params_relu, relu=True)
    assert out_relu.shape == (batch, layer_dimensions[-1])
    assert jnp.allclose(out_relu, ref_relu, atol=1e-5, rtol=1e-5)

    # Tanh path (ReLU=False), now fused into the same kernel.
    params_tanh = init_params(layer_dimensions, pkey_tanh, relu=False)
    out_tanh = jax.block_until_ready(neural_net_forward(x, params_tanh, relu=False))
    ref_tanh = _reference_forward(x, params_tanh, relu=False)
    assert out_tanh.shape == (batch, layer_dimensions[-1])
    assert jnp.allclose(out_tanh, ref_tanh, atol=1e-5, rtol=1e-5)

    print("KERNEL_OK")
</pallas_src>

<mosaic_0001>
module attributes {stable_mosaic.version = 11 : i64} {
  func.func @_mlp_kernel(%arg0: memref<8x16xf32, #tpu.memory_space<vmem>>, %arg1: memref<16x32xf32, #tpu.memory_space<vmem>>, %arg2: memref<1x32xf32, #tpu.memory_space<vmem>>, %arg3: memref<32x32xf32, #tpu.memory_space<vmem>>, %arg4: memref<1x32xf32, #tpu.memory_space<vmem>>, %arg5: memref<32x128xf32, #tpu.memory_space<vmem>>, %arg6: memref<1x128xf32, #tpu.memory_space<vmem>>, %arg7: memref<8x128xf32, #tpu.memory_space<vmem>>) attributes {dimension_semantics = [], scalar_prefetch = 0 : i64, scratch_operands = 0 : i64, tpu.core_type = #tpu.core_type<tc>} {
    %c0 = arith.constant 0 : index
    %c0_0 = arith.constant 0 : index
    %0 = vector.load %arg0[%c0, %c0_0] : memref<8x16xf32, #tpu.memory_space<vmem>>, vector<8x16xf32>
    %c0_1 = arith.constant 0 : index
    %c0_2 = arith.constant 0 : index
    %1 = vector.load %arg1[%c0_1, %c0_2] : memref<16x32xf32, #tpu.memory_space<vmem>>, vector<16x32xf32>
    %c0_3 = arith.constant 0 : index
    %c0_4 = arith.constant 0 : index
    %2 = vector.load %arg2[%c0_3, %c0_4] : memref<1x32xf32, #tpu.memory_space<vmem>>, vector<1x32xf32>
    %cst = arith.constant dense<0.000000e+00> : vector<8x32xf32>
    %3 = tpu.matmul %0, %1, %cst {dimension_numbers = #tpu.dot_dimension_numbers<[1], [0], [0], [1], [0, 0, 1, 1], [], []>} : vector<8x16xf32>, vector<16x32xf32>, vector<8x32xf32> -> vector<8x32xf32>
    %4 = vector.broadcast %2 : vector<1x32xf32> to vector<8x32xf32>
    %5 = arith.addf %3, %4 : vector<8x32xf32>
    %cst_5 = arith.constant 0.000000e+00 : f32
    %6 = vector.broadcast %cst_5 : f32 to vector<8x32xf32>
    %7 = arith.maximumf %5, %6 : vector<8x32xf32>
    %c0_6 = arith.constant 0 : index
    %c0_7 = arith.constant 0 : index
    %8 = vector.load %arg3[%c0_6, %c0_7] : memref<32x32xf32, #tpu.memory_space<vmem>>, vector<32x32xf32>
    %c0_8 = arith.constant 0 : index
    %c0_9 = arith.constant 0 : index
    %9 = vector.load %arg4[%c0_8, %c0_9] : memref<1x32xf32, #tpu.memory_space<vmem>>, vector<1x32xf32>
    %cst_10 = arith.constant dense<0.000000e+00> : vector<8x32xf32>
    %10 = tpu.matmul %7, %8, %cst_10 {dimension_numbers = #tpu.dot_dimension_numbers<[1], [0], [0], [1], [0, 0, 1, 1], [], []>} : vector<8x32xf32>, vector<32x32xf32>, vector<8x32xf32> -> vector<8x32xf32>
    %11 = vector.broadcast %9 : vector<1x32xf32> to vector<8x32xf32>
    %12 = arith.addf %10, %11 : vector<8x32xf32>
    %cst_11 = arith.constant 0.000000e+00 : f32
    %13 = vector.broadcast %cst_11 : f32 to vector<8x32xf32>
    %14 = arith.maximumf %12, %13 : vector<8x32xf32>
    %c0_12 = arith.constant 0 : index
    %c0_13 = arith.constant 0 : index
    %15 = vector.load %arg5[%c0_12, %c0_13] : memref<32x128xf32, #tpu.memory_space<vmem>>, vector<32x128xf32>
    %c0_14 = arith.constant 0 : index
    %c0_15 = arith.constant 0 : index
    %16 = vector.load %arg6[%c0_14, %c0_15] : memref<1x128xf32, #tpu.memory_space<vmem>>, vector<1x128xf32>
    %cst_16 = arith.constant dense<0.000000e+00> : vector<8x128xf32>
    %17 = tpu.matmul %14, %15, %cst_16 {dimension_numbers = #tpu.dot_dimension_numbers<[1], [0], [0], [1], [0, 0, 1, 1], [], []>} : vector<8x32xf32>, vector<32x128xf32>, vector<8x128xf32> -> vector<8x128xf32>
    %18 = vector.broadcast %16 : vector<1x128xf32> to vector<8x128xf32>
    %19 = arith.addf %17, %18 : vector<8x128xf32>
    %c0_17 = arith.constant 0 : index
    %c0_18 = arith.constant 0 : index
    %20 = vector.load %arg7[%c0_17, %c0_18] : memref<8x128xf32, #tpu.memory_space<vmem>>, vector<8x128xf32>
    tpu.vector_store %arg7[%c0_17, %c0_18], %19 {strides = array<i32>} : memref<8x128xf32, #tpu.memory_space<vmem>>, vector<8x128xf32>,
    return
  }
}

</mosaic_0001>

<llo_original>
// kernel: neural_net_forward.1
$region0: #{neural_net_forward.1}
  #allocation0 [shape = 'u32[]', space=smem, size = 0x4, offset = 0x4, fixed_abs, tag = 'smem constant byte address 0x4 - core index']
  #allocation1 [shape = 'u32[144,128]{1,0:T(1,128)}', space=vmem, size = 0x12000, scoped, tag = 'internal scratch']
  %s0 = inlined_call_operand.vmem [shape: f32[8,16], index: 0, kind: input, shape index: {}]
  %s1 = inlined_call_operand.vmem [shape: f32[16,32], index: 1, kind: input, shape index: {}]
  %s2 = inlined_call_operand.vmem [shape: f32[1,32], index: 2, kind: input, shape index: {}]
  %s3 = inlined_call_operand.vmem [shape: f32[32,32], index: 3, kind: input, shape index: {}]
  %s4 = inlined_call_operand.vmem [shape: f32[1,32], index: 4, kind: input, shape index: {}]
  %s5 = inlined_call_operand.vmem [shape: f32[32,128], index: 5, kind: input, shape index: {}]
  %s6 = inlined_call_operand.vmem [shape: f32[1,128], index: 6, kind: input, shape index: {}]
  %s7 = inlined_call_operand.vmem [shape: f32[8,128], index: 7, kind: output, shape index: {}]
  %s8 = sld [smem:[#allocation0]]
  $region38: #{neural_net_forward.1} parent=0
    _
  %s10 = ssub.s32 1, %s8
  %s11 = scalar_select 0, %s10, %s8
  // Predicated region
  $region2: #{neural_net_forward.1} parent=0 // pred_check
    _
  $region3: #{neural_net_forward.1} parent=0 // pred_check_branch
    %13 = sbr.rel (0) target = $region5
  $region4: #{neural_net_forward.1} parent=0 // pred_region
    _
  $region5: #{neural_net_forward.1} parent=0 // pred_fallthru
    _
  // Predicated region
  $region6: #{neural_net_forward.1} parent=0 // pred_check
    _
  $region7: #{neural_net_forward.1} parent=0 // pred_check_branch
    %15 = sbr.rel (0) target = $region9
  $region8: #{neural_net_forward.1} parent=0 // pred_region
    _
  $region9: #{neural_net_forward.1} parent=0 // pred_fallthru
    _
  // Predicated region
  $region10: #{neural_net_forward.1} parent=0 // pred_check
    _
  $region11: #{neural_net_forward.1} parent=0 // pred_check_branch
    %17 = sbr.rel (0) target = $region13
  $region12: #{neural_net_forward.1} parent=0 // pred_region
    _
  $region13: #{neural_net_forward.1} parent=0 // pred_fallthru
    _
  // Predicated region
  $region14: #{neural_net_forward.1} parent=0 // pred_check
    _
  $region15: #{neural_net_forward.1} parent=0 // pred_check_branch
    %19 = sbr.rel (0) target = $region17
  $region16: #{neural_net_forward.1} parent=0 // pred_region
    _
  $region17: #{neural_net_forward.1} parent=0 // pred_fallthru
    _
  // Predicated region
  $region18: #{neural_net_forward.1} parent=0 // pred_check
    _
  $region19: #{neural_net_forward.1} parent=0 // pred_check_branch
    %21 = sbr.rel (0) target = $region21
  $region20: #{neural_net_forward.1} parent=0 // pred_region
    _
  $region21: #{neural_net_forward.1} parent=0 // pred_fallthru
    _
  // Predicated region
  $region22: #{neural_net_forward.1} parent=0 // pred_check
    _
  $region23: #{neural_net_forward.1} parent=0 // pred_check_branch
    %23 = sbr.rel (0) target = $region25
  $region24: #{neural_net_forward.1} parent=0 // pred_region
    _
  $region25: #{neural_net_forward.1} parent=0 // pred_fallthru
    _
  // Predicated region
  $region26: #{neural_net_forward.1} parent=0 // pred_check
    _
  $region27: #{neural_net_forward.1} parent=0 // pred_check_branch
    %25 = sbr.rel (0) target = $region29
  $region28: #{neural_net_forward.1} parent=0 // pred_region
    _
  $region29: #{neural_net_forward.1} parent=0 // pred_fallthru
    _
  %v26 = vld [vmem:[%s0] sm:$0xff]
  %v27 = vld [vmem:[%s1] sm:$0xff]
  %v28 = vld [vmem:[%s1 + $0x8] sm:$0xff]
  %v29 = vld [vmem:[%s2] sm:$0x1]
  %v31 = vlaneseq
  %v32 = vshrl.u32 %v31, 7
  %v33 = vsub.s32 0, %v32
  %v34 = vrot.slane %v29, %v33
  %vm36 = vcmask 130048
  %v38 = vsel %vm36, %v26, 0
  %40 = vmatprep.subr.mxu0 0.0
  %41 = vmatpush1.msra.mxu0 %v27
  %42 = vmatprep.subr.mxu0 0.0
  %43 = vmatpush1.msra.mxu0 %v28
  %44 = vmatprep.subr.mxu0 0.0
  %45 = vmatpush1.msra.mxu0 0.0
  %46 = vmatprep.subr.mxu0 0.0
  %47 = vmatpush1.msra.mxu0 0.0
  %48 = vmatprep.subr.mxu0 0.0
  %49 = vmatpush1.msra.mxu0 0.0
  %50 = vmatprep.subr.mxu0 0.0
  %51 = vmatpush1.msra.mxu0 0.0
  %52 = vmatprep.subr.mxu0 0.0
  %53 = vmatpush1.msra.mxu0 0.0
  %54 = vmatprep.subr.mxu0 0.0
  %55 = vmatpush1.msra.mxu0 0.0
  %56 = vmatprep.subr.mxu0 0.0
  %57 = vmatpush1.msra.mxu0 0.0
  %58 = vmatprep.subr.mxu0 0.0
  %59 = vmatpush1.msra.mxu0 0.0
  %60 = vmatprep.subr.mxu0 0.0
  %61 = vmatpush1.msra.mxu0 0.0
  %62 = vmatprep.subr.mxu0 0.0
  %63 = vmatpush1.msra.mxu0 0.0
  %64 = vmatprep.subr.mxu0 0.0
  %65 = vmatpush1.msra.mxu0 0.0
  %66 = vmatprep.subr.mxu0 0.0
  %67 = vmatpush1.msra.mxu0 0.0
  %68 = vmatprep.subr.mxu0 0.0
  %69 = vmatpush1.msra.mxu0 0.0
  %70 = vmatprep.subr.mxu0 0.0
  %71 = vmatpush1.msra.mxu0 0.0
  %72 = vmatprep.subr.mxu0 0.0
  %73 = vmatpush1.msra.mxu0 0.0
  %74 = vmatprep.subr.mxu0 0.0
  %75 = vmatpush1.msra.mxu0 0.0
  %76 = vmatprep.subr.mxu0 0.0
  %77 = vmatpush1.msra.mxu0 0.0
  %78 = vmatprep.subr.mxu0 0.0
  %79 = vmatpush1.msra.mxu0 0.0
  %80 = vmatprep.subr.mxu0 0.0
  %81 = vmatpush1.msra.mxu0 0.0
  %82 = vmatprep.subr.mxu0 0.0
  %83 = vmatpush1.msra.mxu0 0.0
  %84 = vmatprep.subr.mxu0 0.0
  %85 = vmatpush1.msra.mxu0 0.0
  %86 = vmatprep.subr.mxu0 0.0
  %87 = vmatpush1.msra.mxu0 0.0
  %88 = vmatprep.subr.mxu0 0.0
  %89 = vmatpush1.msra.mxu0 0.0
  %90 = vmatprep.subr.mxu0 0.0
  %91 = vmatpush1.msra.mxu0 0.0
  %92 = vmatprep.subr.mxu0 0.0
  %93 = vmatpush1.msra.mxu0 0.0
  %94 = vmatprep.subr.mxu0 0.0
  %95 = vmatpush1.msra.mxu0 0.0
  %96 = vmatprep.subr.mxu0 0.0
  %97 = vmatpush1.msra.mxu0 0.0
  %98 = vmatprep.subr.mxu0 0.0
  %99 = vmatpush1.msra.mxu0 0.0
  %100 = vmatprep.subr.mxu0 0.0
  %101 = vmatpush1.msra.mxu0 0.0
  %102 = vmatprep.subr.mxu0 0.0
  %103 = vmatpush1.msra.mxu0 0.0
  %104 = vmatprep.mubr.f32.mxu0 0.0
  %105 = vmatmul.mubr.f32.gmra.mrb[0].mxu0 %v38
  %v106 = vpop.f32.mrb[0].mxu0
  %v107 = vadd.f32 %v34, %v106
  %v108 = vpop.f32.mrb[0].mxu0
  %109 = vdwg.mxu0
  %v110 = vmax.f32 %v107, 0.0
  %v111 = vld [vmem:[%s3] sm:$0xff]
  %v112 = vld [vmem:[%s3 + $0x8] sm:$0xff]
  %v113 = vld [vmem:[%s3 + $0x10] sm:$0xff]
  %v114 = vld [vmem:[%s3 + $0x18] sm:$0xff]
  %v115 = vld [vmem:[%s4] sm:$0x1]
  %v117 = vlaneseq
  %v118 = vshrl.u32 %v117, 7
  %v119 = vsub.s32 0, %v118
  %v120 = vrot.slane %v115, %v119
  %vm122 = vcmask 261120
  %v124 = vsel %vm122, %v110, 0
  %126 = vmatprep.subr.mxu0 0.0
  %127 = vmatpush1.msra.mxu0 %v111
  %128 = vmatprep.subr.mxu0 0.0
  %129 = vmatpush1.msra.mxu0 %v112
  %130 = vmatprep.subr.mxu0 0.0
  %131 = vmatpush1.msra.mxu0 %v113
  %132 = vmatprep.subr.mxu0 0.0
  %133 = vmatpush1.msra.mxu0 %v114
  %134 = vmatprep.subr.mxu0 0.0
  %135 = vmatpush1.msra.mxu0 0.0
  %136 = vmatprep.subr.mxu0 0.0
  %137 = vmatpush1.msra.mxu0 0.0
  %138 = vmatprep.subr.mxu0 0.0
  %139 = vmatpush1.msra.mxu0 0.0
  %140 = vmatprep.subr.mxu0 0.0
  %141 = vmatpush1.msra.mxu0 0.0
  %142 = vmatprep.subr.mxu0 0.0
  %143 = vmatpush1.msra.mxu0 0.0
  %144 = vmatprep.subr.mxu0 0.0
  %145 = vmatpush1.msra.mxu0 0.0
  %146 = vmatprep.subr.mxu0 0.0
  %147 = vmatpush1.msra.mxu0 0.0
  %148 = vmatprep.subr.mxu0 0.0
  %149 = vmatpush1.msra.mxu0 0.0
  %150 = vmatprep.subr.mxu0 0.0
  %151 = vmatpush1.msra.mxu0 0.0
  %152 = vmatprep.subr.mxu0 0.0
  %153 = vmatpush1.msra.mxu0 0.0
  %154 = vmatprep.subr.mxu0 0.0
  %155 = vmatpush1.msra.mxu0 0.0
  %156 = vmatprep.subr.mxu0 0.0
  %157 = vmatpush1.msra.mxu0 0.0
  %158 = vmatprep.subr.mxu0 0.0
  %159 = vmatpush1.msra.mxu0 0.0
  %160 = vmatprep.subr.mxu0 0.0
  %161 = vmatpush1.msra.mxu0 0.0
  %162 = vmatprep.subr.mxu0 0.0
  %163 = vmatpush1.msra.mxu0 0.0
  %164 = vmatprep.subr.mxu0 0.0
  %165 = vmatpush1.msra.mxu0 0.0
  %166 = vmatprep.subr.mxu0 0.0
  %167 = vmatpush1.msra.mxu0 0.0
  %168 = vmatprep.subr.mxu0 0.0
  %169 = vmatpush1.msra.mxu0 0.0
  %170 = vmatprep.subr.mxu0 0.0
  %171 = vmatpush1.msra.mxu0 0.0
  %172 = vmatprep.subr.mxu0 0.0
  %173 = vmatpush1.msra.mxu0 0.0
  %174 = vmatprep.subr.mxu0 0.0
  %175 = vmatpush1.msra.mxu0 0.0
  %176 = vmatprep.subr.mxu0 0.0
  %177 = vmatpush1.msra.mxu0 0.0
  %178 = vmatprep.subr.mxu0 0.0
  %179 = vmatpush1.msra.mxu0 0.0
  %180 = vmatprep.subr.mxu0 0.0
  %181 = vmatpush1.msra.mxu0 0.0
  %182 = vmatprep.subr.mxu0 0.0
  %183 = vmatpush1.msra.mxu0 0.0
  %184 = vmatprep.subr.mxu0 0.0
  %185 = vmatpush1.msra.mxu0 0.0
  %186 = vmatprep.subr.mxu0 0.0
  %187 = vmatpush1.msra.mxu0 0.0
  %188 = vmatprep.subr.mxu0 0.0
  %189 = vmatpush1.msra.mxu0 0.0
  %190 = vmatprep.mubr.f32.mxu0 0.0
  %191 = vmatmul.mubr.f32.gmra.mrb[0].mxu0 %v124
  %v192 = vpop.f32.mrb[0].mxu0
  %v193 = vadd.f32 %v120, %v192
  %v194 = vpop.f32.mrb[0].mxu0
  %195 = vdwg.mxu0
  %v196 = vmax.f32 %v193, 0.0
  %v197 = vld [vmem:[%s5] sm:$0xff]
  %v198 = vld [vmem:[%s5 + $0x8] sm:$0xff]
  %v199 = vld [vmem:[%s5 + $0x10] sm:$0xff]
  %v200 = vld [vmem:[%s5 + $0x18] sm:$0xff]
  %v201 = vld [vmem:[%s6] sm:$0x1]
  %v203 = vlaneseq
  %v204 = vshrl.u32 %v203, 7
  %v205 = vsub.s32 0, %v204
  %v206 = vrot.slane %v201, %v205
  %v209 = vsel %vm122, %v196, 0
  %211 = vmatprep.subr.mxu0 0.0
  %212 = vmatpush1.msra.mxu0 %v197
  %213 = vmatprep.subr.mxu0 0.0
  %214 = vmatpush1.msra.mxu0 %v198
  %215 = vmatprep.subr.mxu0 0.0
  %216 = vmatpush1.msra.mxu0 %v199
  %217 = vmatprep.subr.mxu0 0.0
  %218 = vmatpush1.msra.mxu0 %v200
  %219 = vmatprep.subr.mxu0 0.0
  %220 = vmatpush1.msra.mxu0 0.0
  %221 = vmatprep.subr.mxu0 0.0
  %222 = vmatpush1.msra.mxu0 0.0
  %223 = vmatprep.subr.mxu0 0.0
  %224 = vmatpush1.msra.mxu0 0.0
  %225 = vmatprep.subr.mxu0 0.0
  %226 = vmatpush1.msra.mxu0 0.0
  %227 = vmatprep.subr.mxu0 0.0
  %228 = vmatpush1.msra.mxu0 0.0
  %229 = vmatprep.subr.mxu0 0.0
  %230 = vmatpush1.msra.mxu0 0.0
  %231 = vmatprep.subr.mxu0 0.0
  %232 = vmatpush1.msra.mxu0 0.0
  %233 = vmatprep.subr.mxu0 0.0
  %234 = vmatpush1.msra.mxu0 0.0
  %235 = vmatprep.subr.mxu0 0.0
  %236 = vmatpush1.msra.mxu0 0.0
  %237 = vmatprep.subr.mxu0 0.0
  %238 = vmatpush1.msra.mxu0 0.0
  %239 = vmatprep.subr.mxu0 0.0
  %240 = vmatpush1.msra.mxu0 0.0
  %241 = vmatprep.subr.mxu0 0.0
  %242 = vmatpush1.msra.mxu0 0.0
  %243 = vmatprep.subr.mxu0 0.0
  %244 = vmatpush1.msra.mxu0 0.0
  %245 = vmatprep.subr.mxu0 0.0
  %246 = vmatpush1.msra.mxu0 0.0
  %247 = vmatprep.subr.mxu0 0.0
  %248 = vmatpush1.msra.mxu0 0.0
  %249 = vmatprep.subr.mxu0 0.0
  %250 = vmatpush1.msra.mxu0 0.0
  %251 = vmatprep.subr.mxu0 0.0
  %252 = vmatpush1.msra.mxu0 0.0
  %253 = vmatprep.subr.mxu0 0.0
  %254 = vmatpush1.msra.mxu0 0.0
  %255 = vmatprep.subr.mxu0 0.0
  %256 = vmatpush1.msra.mxu0 0.0
  %257 = vmatprep.subr.mxu0 0.0
  %258 = vmatpush1.msra.mxu0 0.0
  %259 = vmatprep.subr.mxu0 0.0
  %260 = vmatpush1.msra.mxu0 0.0
  %261 = vmatprep.subr.mxu0 0.0
  %262 = vmatpush1.msra.mxu0 0.0
  %263 = vmatprep.subr.mxu0 0.0
  %264 = vmatpush1.msra.mxu0 0.0
  %265 = vmatprep.subr.mxu0 0.0
  %266 = vmatpush1.msra.mxu0 0.0
  %267 = vmatprep.subr.mxu0 0.0
  %268 = vmatpush1.msra.mxu0 0.0
  %269 = vmatprep.subr.mxu0 0.0
  %270 = vmatpush1.msra.mxu0 0.0
  %271 = vmatprep.subr.mxu0 0.0
  %272 = vmatpush1.msra.mxu0 0.0
  %273 = vmatprep.subr.mxu0 0.0
  %274 = vmatpush1.msra.mxu0 0.0
  %275 = vmatprep.mubr.f32.mxu0 0.0
  %276 = vmatmul.mubr.f32.gmra.mrb[0].mxu0 %v209
  %v277 = vpop.f32.mrb[0].mxu0
  %v278 = vadd.f32 %v206, %v277
  %v279 = vpop.f32.mrb[0].mxu0
  %280 = vdwg.mxu0
  %281 = vst [vmem:[%s7] sm:$0xff] %v278
  // Predicated region
  $region30: #{neural_net_forward.1} parent=0 // pred_check
    _
  $region31: #{neural_net_forward.1} parent=0 // pred_check_branch
    %283 = sbr.rel (0) target = $region33
  $region32: #{neural_net_forward.1} parent=0 // pred_region
    _
  $region33: #{neural_net_forward.1} parent=0 // pred_fallthru
    _
  // Predicated region
  $region34: #{neural_net_forward.1} parent=0 // pred_check
    _
  $region35: #{neural_net_forward.1} parent=0 // pred_check_branch
    %285 = sbr.rel (0) target = $region37
  $region36: #{neural_net_forward.1} parent=0 // pred_region
    _
  $region37: #{neural_net_forward.1} parent=0 // pred_fallthru
    _

</llo_original>
